<compile_context>
chip_gen: v7x
topology: tpu7x:2x2x1
jax: 0.10.0
libtpu: 0.0.40
codegen_flags: <defaults>
</compile_context>

<pallas_src>
import functools

import jax
import jax.numpy as jnp
from jax.experimental import pallas as pl
from jax.experimental.pallas import tpu as pltpu


def _round_up(x, m):
    return (x + m - 1) // m * m


# ----------------------------------------------------------------------------
# shared tile compute: 1x1 conv as (Cout,Cin) x (Cin,Tm) -> (Cout,Tm)
# ----------------------------------------------------------------------------
def _conv1x1_tile(x, w):
    """x: (Cin, Tm) bf16/f32, w: (Cout, Cin) f32 -> (Cout, Tm) f32."""
    cin, cout = x.shape[0], w.shape[0]
    if cin <= 16 or cout <= 8:
        # Tiny channel counts: an MXU call would only see a sliver; use an
        # unrolled, lane-dense VPU FMA.  Upcast to f32 (works on v5e too).
        xf = x.astype(jnp.float32)
        y = w[:, 0:1] * xf[0:1, :]
        for ci in range(1, cin):
            y = y + w[:, ci:ci + 1] * xf[ci:ci + 1, :]
        return y
    # Realistic channel counts: MXU (bf16 operands where available, f32 acc).
    return jnp.dot(w.astype(x.dtype), x, preferred_element_type=jnp.float32)


# ----------------------------------------------------------------------------
# Fast path: whole problem resident in VMEM -> one fused kernel
# ----------------------------------------------------------------------------
def _fused_kernel(x_ref, w_ref, g_ref, b_ref, o_ref, *, eps):
    # x_ref: (N, Cin, M), w_ref: (Cout, Cin), g/b: (Cout, 1), o: (N, Cout, M)
    n, cin, m = x_ref.shape
    cout = w_ref.shape[0]
    x = x_ref[...].astype(jnp.float32)
    w = w_ref[...]
    # 1x1 conv: unrolled VPU FMA over Cin, broadcast over batch.
    y = w[:, 0:1][None, :, :] * x[:, 0:1, :]
    for ci in range(1, cin):
        y = y + w[:, ci:ci + 1][None, :, :] * x[:, ci:ci + 1, :]
    # Training-mode BN batch statistics over (batch, spatial).
    cnt = jnp.float32(n * m)
    mean = jnp.sum(y, axis=(0, 2), keepdims=True) / cnt
    var = jnp.maximum(
        jnp.sum(y * y, axis=(0, 2), keepdims=True) / cnt - mean * mean, 0.0)
    inv_std = jax.lax.rsqrt(var + eps)
    scale = g_ref[...][None, :, :] * inv_std
    shift = b_ref[...][None, :, :] - mean * scale
    o_ref[...] = (y * scale + shift).astype(o_ref.dtype)


# ----------------------------------------------------------------------------
# Streaming pass 1: per-channel moments of y, accumulated across the tile axis
# ----------------------------------------------------------------------------
def _stats_kernel(x_ref, w_ref, stats_ref, acc_ref, *, m_valid, need_mask):
    t = pl.program_id(1)

    @pl.when(t == 0)
    def _init():
        acc_ref[...] = jnp.zeros_like(acc_ref)

    x = x_ref[0]                                        # (Cin, tile_m)
    if need_mask:
        # Zero the OOB tail lanes of the partial final block so they add
        # nothing to the (bias-free) conv's channel moments.
        tile_m = x.shape[1]
        lane = (jax.lax.broadcasted_iota(jnp.int32, (1, tile_m), 1)
                + t * tile_m)
        x = jnp.where(lane < m_valid, x.astype(jnp.float32), 0.0)
    y = _conv1x1_tile(x, w_ref[...])                    # (Cout, tile_m) f32
    acc_ref[:, 0:1] += jnp.sum(y, axis=1, keepdims=True)
    acc_ref[:, 1:2] += jnp.sum(y * y, axis=1, keepdims=True)

    @pl.when(t == pl.num_programs(1) - 1)
    def _done():
        stats_ref[0] = acc_ref[...]


# ----------------------------------------------------------------------------
# Streaming pass 2: fused conv (BN scale folded into W) + BN shift
# ----------------------------------------------------------------------------
def _conv_bn_kernel(x_ref, w_ref, shift_ref, o_ref):
    y = _conv1x1_tile(x_ref[0], w_ref[...])             # (Cout, tile_m) f32
    o_ref[0] = (y + shift_ref[...]).astype(o_ref.dtype)


@functools.partial(jax.jit,
                   static_argnames=("stride", "eps", "bitW", "max_tile_m"))
def downsample_layer_forward(x_nchw, conv_w, bn_gamma, bn_beta, *,
                             stride=1, eps=1e-5, bitW=8, max_tile_m=1024):
    """Forward of downsample_layer: 1x1 conv (bias=False) + training-mode BN.

    x_nchw : (N, Cin, H, W) float32
    conv_w : (Cout, Cin, 1, 1) float32
    returns: (N, Cout, Ho, Wo) float32
    """
    del bitW  # TODO(synk): bitW quantization spec not provided; unused.
    n, cin, _, _ = x_nchw.shape
    cout = conv_w.shape[0]

    # Strided subsample for the kernel_size=1 conv.  The bf16 downcast is
    # fused into this already-required copy (halves kernel read bytes); with
    # stride == 1 there is no copy, so a standalone downcast pass would cost
    # more HBM traffic than it saves and we keep the input dtype.
    if stride != 1:
        x_s = x_nchw[:, :, ::stride, ::stride]
        store_dtype = (jnp.bfloat16 if x_nchw.dtype == jnp.float32
                       else x_nchw.dtype)
    else:
        x_s = x_nchw
        store_dtype = x_nchw.dtype
    ho, wo = x_s.shape[2], x_s.shape[3]
    m_sp = ho * wo
    x_flat = x_s.reshape(n, cin, m_sp).astype(store_dtype)

    w_mat = conv_w.reshape(cout, cin).astype(jnp.float32)
    gamma = bn_gamma.astype(jnp.float32)
    beta = bn_beta.astype(jnp.float32)
    out_dtype = x_nchw.dtype

    # ---- fast path: single fused pallas_call when VMEM-resident ------------
    resident_bytes = n * m_sp * (cin * 4 + 2 * cout * 4)   # x + y + out (f32)
    if cin <= 16 and resident_bytes <= (4 << 20):
        out_flat = pl.pallas_call(
            functools.partial(_fused_kernel, eps=eps),
            out_shape=jax.ShapeDtypeStruct((n, cout, m_sp), out_dtype),
            grid_spec=pltpu.PrefetchScalarGridSpec(
                num_scalar_prefetch=0,
                grid=(1,),
                in_specs=[
                    pl.BlockSpec((n, cin, m_sp), lambda i: (0, 0, 0)),
                    pl.BlockSpec((cout, cin), lambda i: (0, 0)),
                    pl.BlockSpec((cout, 1), lambda i: (0, 0)),
                    pl.BlockSpec((cout, 1), lambda i: (0, 0)),
                ],
                out_specs=pl.BlockSpec((n, cout, m_sp), lambda i: (0, 0, 0)),
            ),
        )(x_flat, w_mat, gamma.reshape(cout, 1), beta.reshape(cout, 1))
        return out_flat.reshape(n, cout, ho, wo)

    # ---- streaming path: two passes, cdiv grid, no pad / slice -------------
    # Lane tile: round spatial up to 128, capped by max_tile_m and by a VMEM
    # budget (double-buffered in + out) that stays safe on v7x's smaller
    # scoped-VMEM default.  If m_sp < tile_m there is one partial block:
    # pass 1 masks it, pass 2's OOB writes are dropped.
    tile_m = min(max_tile_m, _round_up(m_sp, 128))
    tile_m = max(128, (tile_m // 128) * 128)
    per_lane = 2 * (cin * jnp.dtype(store_dtype).itemsize + cout * 4)
    vmem_cap = max(128, ((8 << 20) // per_lane) // 128 * 128)
    tile_m = min(tile_m, vmem_cap)
    ntiles = pl.cdiv(m_sp, tile_m)
    grid = (n, ntiles)
    need_mask = (m_sp % tile_m) != 0

    # pass 1: channel moments of y (accumulated in VMEM scratch across t,
    # one tiny write per batch).  t is "arbitrary" (accumulator); batch stays
    # "parallel" so v7x megacore still splits work when N > 1.
    stats = pl.pallas_call(
        functools.partial(_stats_kernel, m_valid=m_sp, need_mask=need_mask),
        out_shape=jax.ShapeDtypeStruct((n, cout, 2), jnp.float32),
        grid_spec=pltpu.PrefetchScalarGridSpec(
            num_scalar_prefetch=0,
            grid=grid,
            in_specs=[
                pl.BlockSpec((1, cin, tile_m), lambda b, t: (b, 0, t)),
                pl.BlockSpec((cout, cin), lambda b, t: (0, 0)),
            ],
            out_specs=pl.BlockSpec((1, cout, 2), lambda b, t: (b, 0, 0)),
            scratch_shapes=[pltpu.VMEM((cout, 2), jnp.float32)],
        ),
        compiler_params=pltpu.CompilerParams(
            dimension_semantics=("parallel", "arbitrary")),
    )(x_flat, w_mat)

    # host glue: tiny (n, cout, 2) reduction over batch + fold BN into affine.
    cnt = jnp.float32(n * m_sp)
    ch_sum = jnp.sum(stats[:, :, 0], axis=0)
    ch_sq = jnp.sum(stats[:, :, 1], axis=0)
    mean = ch_sum / cnt
    # NOTE: E[y^2]-E[y]^2 in f32 (biased var, BN training convention); clamp
    # guards tiny negative cancellation.
    var = jnp.maximum(ch_sq / cnt - mean * mean, 0.0)
    inv_std = jax.lax.rsqrt(var + eps)
    scale = gamma * inv_std
    shift = beta - mean * scale
    w_scaled = w_mat * scale[:, None]          # fold BN scale into the weights
    shift_col = shift.reshape(cout, 1)

    # pass 2: fused conv + BN shift, writing only the final output.  OOB lanes
    # of the partial final block are dropped on writeback (no output slice).
    out_flat = pl.pallas_call(
        _conv_bn_kernel,
        out_shape=jax.ShapeDtypeStruct((n, cout, m_sp), out_dtype),
        grid_spec=pltpu.PrefetchScalarGridSpec(
            num_scalar_prefetch=0,
            grid=grid,
            in_specs=[
                pl.BlockSpec((1, cin, tile_m), lambda b, t: (b, 0, t)),
                pl.BlockSpec((cout, cin), lambda b, t: (0, 0)),
                pl.BlockSpec((cout, 1), lambda b, t: (0, 0)),
            ],
            out_specs=pl.BlockSpec((1, cout, tile_m), lambda b, t: (b, 0, t)),
        ),
        compiler_params=pltpu.CompilerParams(
            dimension_semantics=("parallel", "parallel")),
    )(x_flat, w_scaled, shift_col)
    return out_flat.reshape(n, cout, ho, wo)


def _reference(x_nchw, conv_w, gamma, beta, *, stride, eps):
    """Pure-JAX reference: strided 1x1 conv + training-mode BatchNorm2d."""
    y = jax.lax.conv_general_dilated(
        x_nchw, conv_w, window_strides=(stride, stride), padding="VALID",
        dimension_numbers=("NCHW", "OIHW", "NCHW"))
    mean = jnp.mean(y, axis=(0, 2, 3), keepdims=True)
    var = jnp.mean((y - mean) ** 2, axis=(0, 2, 3), keepdims=True)
    g = gamma.reshape(1, -1, 1, 1)
    b = beta.reshape(1, -1, 1, 1)
    return g * (y - mean) * jax.lax.rsqrt(var + eps) + b


if __name__ == "__main__":
    # Module config: downsample_layer(inplanes=4, planes=8, bitW=8,
    #                                 kernel_size=1, stride=2, bias=False)
    N, CIN, H, W = 2, 4, 16, 16
    COUT, STRIDE, EPS = 8, 2, 1e-5

    key = jax.random.PRNGKey(0)
    kx, kw = jax.random.split(key)
    x = jax.random.normal(kx, (N, CIN, H, W), dtype=jnp.float32)
    conv_w = (jax.random.normal(kw, (COUT, CIN, 1, 1), dtype=jnp.float32)
              * (1.0 / jnp.sqrt(CIN)))
    bn_gamma = jnp.ones((COUT,), jnp.float32)   # nn.BatchNorm2d default init
    bn_beta = jnp.zeros((COUT,), jnp.float32)

    out = jax.block_until_ready(
        downsample_layer_forward(x, conv_w, bn_gamma, bn_beta,
                                 stride=STRIDE, eps=EPS, bitW=8))
    assert out.shape == (N, COUT, H // STRIDE, W // STRIDE), out.shape

    # Tight check: identical math with the activations pre-rounded through the
    # bf16 storage format the kernel deliberately uses (per the perf review).
    x_rt = x.astype(jnp.bfloat16).astype(jnp.float32)
    ref_tight = _reference(x_rt, conv_w, bn_gamma, bn_beta,
                           stride=STRIDE, eps=EPS)
    err_t = float(jnp.max(jnp.abs(out - ref_tight)))
    assert jnp.allclose(out, ref_tight, atol=3e-4, rtol=3e-4), err_t

    # Loose check against the full-f32 module semantics (bf16 activation
    # storage is the only approximation).
    ref_f32 = _reference(x, conv_w, bn_gamma, bn_beta, stride=STRIDE, eps=EPS)
    err_l = float(jnp.max(jnp.abs(out - ref_f32)))
    assert jnp.allclose(out, ref_f32, atol=5e-2, rtol=5e-2), err_l

    print("KERNEL_OK")
</pallas_src>

<mosaic_0001>
module attributes {stable_mosaic.version = 11 : i64} {
  func.func @_fused_kernel(%arg0: i32, %arg1: memref<2x4x64xbf16, #tpu.memory_space<vmem>>, %arg2: memref<8x4xf32, #tpu.memory_space<vmem>>, %arg3: memref<8x1xf32, #tpu.memory_space<vmem>>, %arg4: memref<8x1xf32, #tpu.memory_space<vmem>>, %arg5: memref<2x8x64xf32, #tpu.memory_space<vmem>>) attributes {dimension_semantics = [#tpu.dimension_semantics<arbitrary>], iteration_bounds = array<i64: 1>, scalar_prefetch = 0 : i64, scratch_operands = 0 : i64, tpu.core_type = #tpu.core_type<tc>, window_params = [{pipeline_mode = #tpu.pipeline_mode<synchronous>, transform_indices = @transform_0, window_bounds = array<i64: 2, 4, 64>}, {pipeline_mode = #tpu.pipeline_mode<synchronous>, transform_indices = @transform_1, window_bounds = array<i64: 8, 4>}, {pipeline_mode = #tpu.pipeline_mode<synchronous>, transform_indices = @transform_2, window_bounds = array<i64: 8, 1>}, {pipeline_mode = #tpu.pipeline_mode<synchronous>, transform_indices = @transform_3, window_bounds = array<i64: 8, 1>}, {pipeline_mode = #tpu.pipeline_mode<synchronous>, transform_indices = @transform_4, window_bounds = array<i64: 2, 8, 64>}]} {
    %c0 = arith.constant 0 : index
    %c0_0 = arith.constant 0 : index
    %c0_1 = arith.constant 0 : index
    %0 = vector.load %arg1[%c0, %c0_0, %c0_1] : memref<2x4x64xbf16, #tpu.memory_space<vmem>>, vector<2x4x64xbf16>
    %1 = arith.extf %0 : vector<2x4x64xbf16> to vector<2x4x64xf32>
    %c0_2 = arith.constant 0 : index
    %c0_3 = arith.constant 0 : index
    %2 = vector.load %arg2[%c0_2, %c0_3] : memref<8x4xf32, #tpu.memory_space<vmem>>, vector<8x4xf32>
    %3 = vector.extract_strided_slice %2 {offsets = [0, 0], sizes = [8, 1], strides = [1, 1]} : vector<8x4xf32> to vector<8x1xf32>
    %4 = vector.shape_cast %3 : vector<8x1xf32> to vector<1x8x1xf32>
    %5 = vector.extract_strided_slice %1 {offsets = [0, 0, 0], sizes = [2, 1, 64], strides = [1, 1, 1]} : vector<2x4x64xf32> to vector<2x1x64xf32>
    %6 = vector.broadcast %4 : vector<1x8x1xf32> to vector<2x8x64xf32>
    %7 = vector.broadcast %5 : vector<2x1x64xf32> to vector<2x8x64xf32>
    %8 = arith.mulf %6, %7 : vector<2x8x64xf32>
    %9 = vector.extract_strided_slice %2 {offsets = [0, 1], sizes = [8, 1], strides = [1, 1]} : vector<8x4xf32> to vector<8x1xf32>
    %10 = vector.shape_cast %9 : vector<8x1xf32> to vector<1x8x1xf32>
    %11 = vector.extract_strided_slice %1 {offsets = [0, 1, 0], sizes = [2, 1, 64], strides = [1, 1, 1]} : vector<2x4x64xf32> to vector<2x1x64xf32>
    %12 = vector.broadcast %10 : vector<1x8x1xf32> to vector<2x8x64xf32>
    %13 = vector.broadcast %11 : vector<2x1x64xf32> to vector<2x8x64xf32>
    %14 = arith.mulf %12, %13 : vector<2x8x64xf32>
    %15 = arith.addf %8, %14 : vector<2x8x64xf32>
    %16 = vector.extract_strided_slice %2 {offsets = [0, 2], sizes = [8, 1], strides = [1, 1]} : vector<8x4xf32> to vector<8x1xf32>
    %17 = vector.shape_cast %16 : vector<8x1xf32> to vector<1x8x1xf32>
    %18 = vector.extract_strided_slice %1 {offsets = [0, 2, 0], sizes = [2, 1, 64], strides = [1, 1, 1]} : vector<2x4x64xf32> to vector<2x1x64xf32>
    %19 = vector.broadcast %17 : vector<1x8x1xf32> to vector<2x8x64xf32>
    %20 = vector.broadcast %18 : vector<2x1x64xf32> to vector<2x8x64xf32>
    %21 = arith.mulf %19, %20 : vector<2x8x64xf32>
    %22 = arith.addf %15, %21 : vector<2x8x64xf32>
    %23 = vector.extract_strided_slice %2 {offsets = [0, 3], sizes = [8, 1], strides = [1, 1]} : vector<8x4xf32> to vector<8x1xf32>
    %24 = vector.shape_cast %23 : vector<8x1xf32> to vector<1x8x1xf32>
    %25 = vector.extract_strided_slice %1 {offsets = [0, 3, 0], sizes = [2, 1, 64], strides = [1, 1, 1]} : vector<2x4x64xf32> to vector<2x1x64xf32>
    %26 = vector.broadcast %24 : vector<1x8x1xf32> to vector<2x8x64xf32>
    %27 = vector.broadcast %25 : vector<2x1x64xf32> to vector<2x8x64xf32>
    %28 = arith.mulf %26, %27 : vector<2x8x64xf32>
    %29 = arith.addf %22, %28 : vector<2x8x64xf32>
    %cst = arith.constant dense<0.000000e+00> : vector<8xf32>
    %30 = vector.multi_reduction <add>, %29, %cst [0, 2] : vector<2x8x64xf32> to vector<8xf32>
    %31 = vector.shape_cast %30 : vector<8xf32> to vector<1x8x1xf32>
    %cst_4 = arith.constant 1.280000e+02 : f32
    %32 = vector.broadcast %cst_4 : f32 to vector<1x8x1xf32>
    %33 = arith.divf %31, %32 : vector<1x8x1xf32>
    %34 = arith.mulf %29, %29 : vector<2x8x64xf32>
    %cst_5 = arith.constant dense<0.000000e+00> : vector<8xf32>
    %35 = vector.multi_reduction <add>, %34, %cst_5 [0, 2] : vector<2x8x64xf32> to vector<8xf32>
    %36 = vector.shape_cast %35 : vector<8xf32> to vector<1x8x1xf32>
    %cst_6 = arith.constant 1.280000e+02 : f32
    %37 = vector.broadcast %cst_6 : f32 to vector<1x8x1xf32>
    %38 = arith.divf %36, %37 : vector<1x8x1xf32>
    %39 = arith.mulf %33, %33 : vector<1x8x1xf32>
    %40 = arith.subf %38, %39 : vector<1x8x1xf32>
    %cst_7 = arith.constant 0.000000e+00 : f32
    %41 = vector.broadcast %cst_7 : f32 to vector<1x8x1xf32>
    %42 = arith.maximumf %40, %41 : vector<1x8x1xf32>
    %cst_8 = arith.constant 9.99999974E-6 : f32
    %43 = vector.broadcast %cst_8 : f32 to vector<1x8x1xf32>
    %44 = arith.addf %42, %43 : vector<1x8x1xf32>
    %45 = math.rsqrt %44 : vector<1x8x1xf32>
    %c0_9 = arith.constant 0 : index
    %c0_10 = arith.constant 0 : index
    %46 = vector.load %arg3[%c0_9, %c0_10] : memref<8x1xf32, #tpu.memory_space<vmem>>, vector<8x1xf32>
    %47 = vector.shape_cast %46 : vector<8x1xf32> to vector<1x8x1xf32>
    %48 = arith.mulf %47, %45 : vector<1x8x1xf32>
    %c0_11 = arith.constant 0 : index
    %c0_12 = arith.constant 0 : index
    %49 = vector.load %arg4[%c0_11, %c0_12] : memref<8x1xf32, #tpu.memory_space<vmem>>, vector<8x1xf32>
    %50 = vector.shape_cast %49 : vector<8x1xf32> to vector<1x8x1xf32>
    %51 = arith.mulf %33, %48 : vector<1x8x1xf32>
    %52 = arith.subf %50, %51 : vector<1x8x1xf32>
    %53 = vector.broadcast %48 : vector<1x8x1xf32> to vector<2x8x64xf32>
    %54 = arith.mulf %29, %53 : vector<2x8x64xf32>
    %55 = vector.broadcast %52 : vector<1x8x1xf32> to vector<2x8x64xf32>
    %56 = arith.addf %54, %55 : vector<2x8x64xf32>
    %c0_13 = arith.constant 0 : index
    %c0_14 = arith.constant 0 : index
    %c0_15 = arith.constant 0 : index
    %57 = vector.load %arg5[%c0_13, %c0_14, %c0_15] : memref<2x8x64xf32, #tpu.memory_space<vmem>>, vector<2x8x64xf32>
    tpu.vector_store %arg5[%c0_13, %c0_14, %c0_15], %56 {strides = array<i32>} : memref<2x8x64xf32, #tpu.memory_space<vmem>>, vector<2x8x64xf32>,
    return
  }
  func.func @transform_0(%arg0: i32) -> (i32, i32, i32) {
    %c0_i32 = arith.constant 0 : i32
    %c0_i32_0 = arith.constant 0 : i32
    %c0_i32_1 = arith.constant 0 : i32
    %c0_i32_2 = arith.constant 0 : i32
    return %c0_i32, %c0_i32_0, %c0_i32_1 : i32, i32, i32
  }
  func.func @transform_1(%arg0: i32) -> (i32, i32) {
    %c0_i32 = arith.constant 0 : i32
    %c0_i32_0 = arith.constant 0 : i32
    %c0_i32_1 = arith.constant 0 : i32
    return %c0_i32, %c0_i32_0 : i32, i32
  }
  func.func @transform_2(%arg0: i32) -> (i32, i32) {
    %c0_i32 = arith.constant 0 : i32
    %c0_i32_0 = arith.constant 0 : i32
    %c0_i32_1 = arith.constant 0 : i32
    return %c0_i32, %c0_i32_0 : i32, i32
  }
  func.func @transform_3(%arg0: i32) -> (i32, i32) {
    %c0_i32 = arith.constant 0 : i32
    %c0_i32_0 = arith.constant 0 : i32
    %c0_i32_1 = arith.constant 0 : i32
    return %c0_i32, %c0_i32_0 : i32, i32
  }
  func.func @transform_4(%arg0: i32) -> (i32, i32, i32) {
    %c0_i32 = arith.constant 0 : i32
    %c0_i32_0 = arith.constant 0 : i32
    %c0_i32_1 = arith.constant 0 : i32
    %c0_i32_2 = arith.constant 0 : i32
    return %c0_i32, %c0_i32_0, %c0_i32_1 : i32, i32, i32
  }
}

</mosaic_0001>

<llo_original>
// kernel: downsample_layer_forward.1
$region0: #{downsample_layer_forward.1}
  #allocation0 [shape = 'u32[]', space=smem, size = 0x4, offset = 0x4, fixed_abs, tag = 'smem constant byte address 0x4 - core index']
  #allocation1 [shape = 'u32[144,128]{1,0:T(1,128)}', space=vmem, size = 0x12000, scoped, tag = 'internal scratch']
  %s0 = inlined_call_operand.vmem [shape: bf16[2,4,64], index: 0, kind: input, shape index: {}]
  %s1 = inlined_call_operand.vmem [shape: f32[8,4], index: 1, kind: input, shape index: {}]
  %s2 = inlined_call_operand.vmem [shape: f32[8,1], index: 2, kind: input, shape index: {}]
  %s3 = inlined_call_operand.vmem [shape: f32[8,1], index: 3, kind: input, shape index: {}]
  %s4 = inlined_call_operand.vmem [shape: f32[2,8,64], index: 4, kind: output, shape index: {}]
  %s5 = sld [smem:[#allocation0]]
  $region26: #{downsample_layer_forward.1} parent=0
    _
  %s7 = ssub.s32 1, %s5
  %s8 = scalar_select 0, %s7, %s5
  // Predicated region
  $region2: #{downsample_layer_forward.1} parent=0 // pred_check
    _
  $region3: #{downsample_layer_forward.1} parent=0 // pred_check_branch
    %10 = sbr.rel (0) target = $region5
  $region4: #{downsample_layer_forward.1} parent=0 // pred_region
    _
  $region5: #{downsample_layer_forward.1} parent=0 // pred_fallthru
    _
  // Predicated region
  $region6: #{downsample_layer_forward.1} parent=0 // pred_check
    _
  $region7: #{downsample_layer_forward.1} parent=0 // pred_check_branch
    %12 = sbr.rel (0) target = $region9
  $region8: #{downsample_layer_forward.1} parent=0 // pred_region
    _
  $region9: #{downsample_layer_forward.1} parent=0 // pred_fallthru
    _
  // Predicated region
  $region10: #{downsample_layer_forward.1} parent=0 // pred_check
    _
  $region11: #{downsample_layer_forward.1} parent=0 // pred_check_branch
    %14 = sbr.rel (0) target = $region13
  $region12: #{downsample_layer_forward.1} parent=0 // pred_region
    _
  $region13: #{downsample_layer_forward.1} parent=0 // pred_fallthru
    _
  // Predicated region
  $region14: #{downsample_layer_forward.1} parent=0 // pred_check
    _
  $region15: #{downsample_layer_forward.1} parent=0 // pred_check_branch
    %16 = sbr.rel (0) target = $region17
  $region16: #{downsample_layer_forward.1} parent=0 // pred_region
    _
  $region17: #{downsample_layer_forward.1} parent=0 // pred_fallthru
    _
  %v17 = vld [vmem:[%s0] sm:$0x3]
  %v18 = vld [vmem:[%s0 + $0x2] sm:$0x3]
  %v19 = vunpack.c.l.bf16 %v17
  %v20 = vunpack.c.l.bf16 %v18
  %v21 = vld [vmem:[%s1] sm:$0xff]
  %23 = vset.pattern.permute.xlu0 0
  %24 = vperm.xlu0 %23, %v21
  %v25 = vpop.permute.xlu0 %24
  %v27 = vlaneseq
  %v28 = vshrl.u32 %v27, 7
  %v29 = vsub.s32 0, %v28
  %v30 = vrot.slane %v19, %v29
  %v31 = vlaneseq
  %v32 = vshrl.u32 %v31, 7
  %v33 = vsub.s32 0, %v32
  %v34 = vrot.slane %v20, %v33
  %v35 = vmul.f32 %v25, %v30
  %v36 = vmul.f32 %v25, %v34
  %37 = vset.pattern.permute.xlu0 1
  %38 = vperm.xlu0 %37, %v21
  %v39 = vpop.permute.xlu0 %38
  %v41 = vlaneseq
  %v42 = vshrl.u32 %v41, 7
  %v43 = vsub.s32 1, %v42
  %v44 = vrot.slane %v19, %v43
  %v45 = vlaneseq
  %v46 = vshrl.u32 %v45, 7
  %v47 = vsub.s32 1, %v46
  %v48 = vrot.slane %v20, %v47
  %v49 = vmul.f32 %v39, %v44
  %v50 = vmul.f32 %v39, %v48
  %v51 = vadd.f32 %v35, %v49
  %v52 = vadd.f32 %v36, %v50
  %53 = vset.pattern.permute.xlu0 2
  %54 = vperm.xlu0 %53, %v21
  %v55 = vpop.permute.xlu0 %54
  %v57 = vlaneseq
  %v58 = vshrl.u32 %v57, 7
  %v59 = vsub.s32 2, %v58
  %v60 = vrot.slane %v19, %v59
  %v61 = vlaneseq
  %v62 = vshrl.u32 %v61, 7
  %v63 = vsub.s32 2, %v62
  %v64 = vrot.slane %v20, %v63
  %v65 = vmul.f32 %v55, %v60
  %v66 = vmul.f32 %v55, %v64
  %v67 = vadd.f32 %v51, %v65
  %v68 = vadd.f32 %v52, %v66
  %69 = vset.pattern.permute.xlu0 3
  %70 = vperm.xlu0 %69, %v21
  %v71 = vpop.permute.xlu0 %70
  %v73 = vlaneseq
  %v74 = vshrl.u32 %v73, 7
  %v75 = vsub.s32 3, %v74
  %v76 = vrot.slane %v19, %v75
  %v77 = vlaneseq
  %v78 = vshrl.u32 %v77, 7
  %v79 = vsub.s32 3, %v78
  %v80 = vrot.slane %v20, %v79
  %v81 = vmul.f32 %v71, %v76
  %v82 = vmul.f32 %v71, %v80
  %v83 = vadd.f32 %v67, %v81
  %v84 = vadd.f32 %v68, %v82
  %vm85 = vcmask 523264
  %v86 = vsel %vm85, %v83, 0.0
  %v87 = vsel %vm85, %v84, 0.0
  %v88 = vadd.f32 %v86, %v87
  %89 = vadd.xlane.f32.xlu0 %v88
  %v90 = vpop.xlane.xlu0 %89
  %v91 = vrcp.pop 128.0
  %v92 = vmul.f32 %v90, %v91
  %v93 = vmul.f32 %v83, %v83
  %v94 = vmul.f32 %v84, %v84
  %v95 = vsel %vm85, %v93, 0.0
  %v96 = vsel %vm85, %v94, 0.0
  %v97 = vadd.f32 %v95, %v96
  %98 = vadd.xlane.f32.xlu0 %v97
  %v99 = vpop.xlane.xlu0 %98
  %v100 = vmul.f32 %v99, %v91
  %v101 = vmul.f32 %v92, %v92
  %v102 = vsub.f32 %v100, %v101
  %v103 = vmax.f32 %v102, 0.0
  %v104 = vadd.f32 %v103, 1e-05
  %v105 = vrsqrt.pop %v104
  %v106 = vld [vmem:[%s2] sm:$0xff]
  %v107 = vmul.f32 %v106, %v105
  %v108 = vld [vmem:[%s3] sm:$0xff]
  %v109 = vmul.f32 %v92, %v107
  %v110 = vsub.f32 %v108, %v109
  %112 = vset.pattern.permute.xlu0 0
  %113 = vperm.xlu0 %112, %v107
  %v114 = vpop.permute.xlu0 %113
  %v116 = vmul.f32 %v83, %v114
  %v117 = vmul.f32 %v84, %v114
  %119 = vset.pattern.permute.xlu0 0
  %120 = vperm.xlu0 %119, %v110
  %v121 = vpop.permute.xlu0 %120
  %v123 = vadd.f32 %v116, %v121
  %v124 = vadd.f32 %v117, %v121
  %125 = vst.msk [vmem:[%s4] sm:$0xff] %vm85, %v123
  %126 = vst.msk [vmem:[%s4 + $0x8] sm:$0xff] %vm85, %v124
  // Predicated region
  $region18: #{downsample_layer_forward.1} parent=0 // pred_check
    _
  $region19: #{downsample_layer_forward.1} parent=0 // pred_check_branch
    %128 = sbr.rel (0) target = $region21
  $region20: #{downsample_layer_forward.1} parent=0 // pred_region
    _
  $region21: #{downsample_layer_forward.1} parent=0 // pred_fallthru
    _
  // Predicated region
  $region22: #{downsample_layer_forward.1} parent=0 // pred_check
    _
  $region23: #{downsample_layer_forward.1} parent=0 // pred_check_branch
    %130 = sbr.rel (0) target = $region25
  $region24: #{downsample_layer_forward.1} parent=0 // pred_region
    _
  $region25: #{downsample_layer_forward.1} parent=0 // pred_fallthru
    _

</llo_original>
